<compile_context>
chip_gen: v5e
topology: v5e:2x2
jax: 0.10.0
libtpu: 0.0.40
codegen_flags: <defaults>
</compile_context>

<pallas_src>
import math

import jax
import jax.numpy as jnp
from jax.experimental import pallas as pl
from jax.experimental.pallas import tpu as pltpu  # noqa: F401  (kept for TPU-specific extensions)


def _vspec(shape):
    """Full-array VMEM block spec (gridless call)."""
    return pl.BlockSpec(shape, lambda: (0,) * len(shape))


# ------------------------------ fused kernel --------------------------------
def net_kernel(x_ref, bias_ref,                 # [N, F], [N, heads*N]
               w1_ref, b1_ref,                  # [F, H], [1, H]
               wg_ref, adst_ref, asrc_ref, bg_ref,  # [L,H,H], [L,H,hN]x2, [L,1,H]
               srcdiag_ref, headmask_ref,       # [N, hN], [hN, H]
               sel0_ref, sel1_ref,              # [B, N], [B, N]
               w3t_ref, w3b_ref, b3_ref,        # [H, C], [H, C], [1, C]
               o_ref):                          # [B, C]
    N = x_ref.shape[0]
    L = wg_ref.shape[0]
    hN = headmask_ref.shape[0]
    heads = hN // N

    # ---- lin1 ----
    h = jnp.dot(x_ref[...], w1_ref[...],
                preferred_element_type=jnp.float32) + b1_ref[...]           # [N, H]

    # hoisted per-graph constants (reused by every layer / head)
    bias = bias_ref[...]            # [N, hN] additive softmax mask (0 / -1e30), head-tiled
    src_diag = srcdiag_ref[...]     # [N, hN] source-diagonal selector
    head_mask = headmask_ref[...]   # [hN, H] head-block mask == softmax-denominator matrix

    # ---- stacked GATConv + ELU (L is small & static -> unrolled) ----
    for l in range(L):
        wg = wg_ref[l]              # [H, H]
        A_dst = adst_ref[l]         # [H, hN]  block-diag att_dst, columns repeated N times
        A_src = asrc_ref[l]         # [H, hN]  block-diag att_src, columns repeated N times
        bg = bg_ref[l]              # [1, H]

        hw = jnp.dot(h, wg, preferred_element_type=jnp.float32)             # [N, H]

        # attention logits for ALL heads batched along lanes
        dst_part = jnp.dot(hw, A_dst, preferred_element_type=jnp.float32)   # [N, hN]
        src_all = jnp.dot(hw, A_src, preferred_element_type=jnp.float32)    # [N, hN]
        src_row = jnp.sum(src_diag * src_all, axis=0, keepdims=True)        # [1, hN]

        # e[i, hd*N + j] = a_dst_i^hd + a_src_j^hd
        e = dst_part + src_row
        e = jnp.where(e > 0, e, 0.2 * e)                 # LeakyReLU(0.2)
        e = e + bias                                     # mask non-edges
        e = e - jnp.max(e, axis=1, keepdims=True)        # global row max (exact per head)
        p = jnp.exp(e)                                   # masked entries -> 0

        # aggregation: one matmul for the numerator, one for the per-head denom
        hw_stacked = jnp.concatenate([hw] * heads, axis=0) * head_mask      # [hN, H]
        num = jnp.dot(p, hw_stacked, preferred_element_type=jnp.float32)    # [N, H]
        den = jnp.dot(p, head_mask, preferred_element_type=jnp.float32)     # [N, H]
        out = num * pl.reciprocal(den, approx=True) + bg

        h = jnp.where(out > 0, out, jnp.exp(jnp.minimum(out, 0.0)) - 1.0)   # ELU

    # ---- target-node gather as matmul, folded into lin3 ----
    g0 = jnp.dot(sel0_ref[...], h, preferred_element_type=jnp.float32)      # [B, H]
    g1 = jnp.dot(sel1_ref[...], h, preferred_element_type=jnp.float32)      # [B, H]
    o_ref[...] = (jnp.dot(g0, w3t_ref[...], preferred_element_type=jnp.float32)
                  + jnp.dot(g1, w3b_ref[...], preferred_element_type=jnp.float32)
                  + b3_ref[...])


# ------------------------------ host wrapper ---------------------------------
def block_diag_att(att):
    """[heads, out_dim] attention vector -> block-diagonal [heads*out_dim, heads]."""
    heads, out_dim = att.shape
    eye = jnp.eye(heads, dtype=att.dtype)
    return jnp.einsum('ho,hg->hog', att, eye).reshape(heads * out_dim, heads)


def net_forward(x, adj, target_mask, params):
    (w1, b1, wg_all, att_src_all, att_dst_all, bg_all, w3, b3) = params
    N = x.shape[0]
    H = w1.shape[1]
    L = wg_all.shape[0]
    heads, out_dim = att_src_all.shape[1], att_src_all.shape[2]
    hN = heads * N
    B = target_mask.shape[0]
    C = w3.shape[1]

    # --- host-side packing (pure layout, no forward-pass compute hoisted) ---
    def rep(att):                                   # [heads, out_dim] -> [H, heads*N]
        bd = block_diag_att(att)                    # [H, heads]
        return jnp.repeat(bd, N, axis=1)            # each head column repeated N times
    adst_rep = jnp.stack([rep(att_dst_all[l]) for l in range(L)])    # [L, H, hN]
    asrc_rep = jnp.stack([rep(att_src_all[l]) for l in range(L)])    # [L, H, hN]

    # additive softmax mask, tiled across heads
    bias_tiled = jnp.tile(jnp.where(adj > 0, 0.0, -1e30).astype(jnp.float32),
                          (1, heads))                                # [N, hN]
    # src_diag[j, hd*N + j'] = 1 iff j == j'
    src_diag = jnp.tile(jnp.eye(N, dtype=jnp.float32), (1, heads))   # [N, hN]
    # head_mask[hd*N + j, f] = 1 iff f // out_dim == hd
    row_head = jnp.repeat(jnp.arange(heads), N)
    col_head = jnp.arange(H) // out_dim
    head_mask = (row_head[:, None] == col_head[None, :]).astype(jnp.float32)  # [hN, H]

    # target gather as matmul: one-hot selectors + split lin3 weight
    sel0 = jax.nn.one_hot(target_mask[:, 0], N, dtype=jnp.float32)   # [B, N]
    sel1 = jax.nn.one_hot(target_mask[:, 1], N, dtype=jnp.float32)   # [B, N]
    w3_top, w3_bot = w3[:H, :], w3[H:, :]

    return pl.pallas_call(
        net_kernel,
        out_shape=jax.ShapeDtypeStruct((B, C), jnp.float32),
        in_specs=[
            _vspec(x.shape), _vspec(bias_tiled.shape),
            _vspec(w1.shape), _vspec(b1.shape),
            _vspec(wg_all.shape), _vspec(adst_rep.shape),
            _vspec(asrc_rep.shape), _vspec(bg_all.shape),
            _vspec(src_diag.shape), _vspec(head_mask.shape),
            _vspec(sel0.shape), _vspec(sel1.shape),
            _vspec(w3_top.shape), _vspec(w3_bot.shape), _vspec(b3.shape),
        ],
        out_specs=_vspec((B, C)),
    )(x, bias_tiled, w1, b1, wg_all, adst_rep, asrc_rep, bg_all,
      src_diag, head_mask, sel0, sel1, w3_top, w3_bot, b3)


# ------------------------------ parameter init -------------------------------
def glorot_init(key, shape):
    std = math.sqrt(6.0 / (shape[-2] + shape[-1]))
    return jax.random.uniform(key, shape, jnp.float32, -std, std)


# ---------------------------------- main --------------------------------------
if __name__ == "__main__":
    INPUT_SIZE = 16
    HIDDEN = 32
    HEADS = 4
    LAYERS = 2          # args.stack_layer_num
    NUM_CLASSES = 3
    N_NODES = 16
    BATCH = 2

    key = jax.random.PRNGKey(0)
    keys = jax.random.split(key, 16)

    # --- inputs ---
    x = jax.random.normal(keys[0], (N_NODES, INPUT_SIZE), jnp.float32)
    # edge_index [2, E]: row 0 = source, row 1 = target (bidirectional ring)
    src = jnp.arange(N_NODES)
    dst = (jnp.arange(N_NODES) + 1) % N_NODES
    edge_index = jnp.stack([jnp.concatenate([src, dst]),
                            jnp.concatenate([dst, src])]).astype(jnp.int32)
    target_mask = jnp.array([[0, 1], [2, 3]], dtype=jnp.int32)  # two targets / sample

    # --- parameters (deterministic, synthetic) ---
    w1 = glorot_init(keys[1], (INPUT_SIZE, HIDDEN))
    b1 = jnp.zeros((1, HIDDEN), jnp.float32)

    wg_list, asrc_list, adst_list, bg_list = [], [], [], []
    k_i = 2
    for _ in range(LAYERS):
        wg_list.append(glorot_init(keys[k_i], (HIDDEN, HIDDEN))); k_i += 1
        asrc_list.append(glorot_init(keys[k_i], (HEADS, HIDDEN // HEADS))); k_i += 1
        adst_list.append(glorot_init(keys[k_i], (HEADS, HIDDEN // HEADS))); k_i += 1
        bg_list.append(jnp.zeros((1, HIDDEN), jnp.float32))
    wg_all = jnp.stack(wg_list)                      # [L, H, H]
    att_src_all = jnp.stack(asrc_list)               # [L, heads, out_dim]
    att_dst_all = jnp.stack(adst_list)               # [L, heads, out_dim]
    bg_all = jnp.stack(bg_list)                      # [L, 1, H]

    w3 = glorot_init(keys[k_i], (HIDDEN * 2, NUM_CLASSES)); k_i += 1
    b3 = jnp.zeros((1, NUM_CLASSES), jnp.float32)

    # dense adjacency with self-loops: adj[i, j] = 1 iff edge j -> i
    adj = jnp.zeros((N_NODES, N_NODES), jnp.float32)
    adj = adj.at[edge_index[1], edge_index[0]].set(1.0)
    adj = jnp.minimum(adj + jnp.eye(N_NODES, dtype=jnp.float32), 1.0)

    # --- fused forward (eval mode) ---
    # TODO(synk): embed/attention dropout are eval-mode no-ops; unused self.rnn
    # (LSTM) and the label_ids/CrossEntropyLoss branch are not exercised.
    logits = net_forward(
        x, adj, target_mask,
        (w1, b1, wg_all, att_src_all, att_dst_all, bg_all, w3, b3))

    logits = jax.block_until_ready(logits)
    assert logits.shape == (BATCH, NUM_CLASSES)
    assert bool(jnp.all(jnp.isfinite(logits)))
    print("KERNEL_OK")
</pallas_src>

<mosaic_0001>
module attributes {stable_mosaic.version = 11 : i64} {
  func.func @net_kernel(%arg0: memref<16x16xf32, #tpu.memory_space<vmem>>, %arg1: memref<16x64xf32, #tpu.memory_space<vmem>>, %arg2: memref<16x32xf32, #tpu.memory_space<vmem>>, %arg3: memref<1x32xf32, #tpu.memory_space<vmem>>, %arg4: memref<2x32x32xf32, #tpu.memory_space<vmem>>, %arg5: memref<2x32x64xf32, #tpu.memory_space<vmem>>, %arg6: memref<2x32x64xf32, #tpu.memory_space<vmem>>, %arg7: memref<2x1x32xf32, #tpu.memory_space<vmem>>, %arg8: memref<16x64xf32, #tpu.memory_space<vmem>>, %arg9: memref<64x32xf32, #tpu.memory_space<vmem>>, %arg10: memref<2x16xf32, #tpu.memory_space<vmem>>, %arg11: memref<2x16xf32, #tpu.memory_space<vmem>>, %arg12: memref<32x3xf32, #tpu.memory_space<vmem>>, %arg13: memref<32x3xf32, #tpu.memory_space<vmem>>, %arg14: memref<1x3xf32, #tpu.memory_space<vmem>>, %arg15: memref<2x3xf32, #tpu.memory_space<vmem>>) attributes {dimension_semantics = [], scalar_prefetch = 0 : i64, scratch_operands = 0 : i64, tpu.core_type = #tpu.core_type<tc>} {
    %c0 = arith.constant 0 : index
    %c0_0 = arith.constant 0 : index
    %0 = vector.load %arg0[%c0, %c0_0] : memref<16x16xf32, #tpu.memory_space<vmem>>, vector<16x16xf32>
    %c0_1 = arith.constant 0 : index
    %c0_2 = arith.constant 0 : index
    %1 = vector.load %arg2[%c0_1, %c0_2] : memref<16x32xf32, #tpu.memory_space<vmem>>, vector<16x32xf32>
    %cst = arith.constant dense<0.000000e+00> : vector<16x32xf32>
    %2 = tpu.matmul %0, %1, %cst {dimension_numbers = #tpu.dot_dimension_numbers<[1], [0], [0], [1], [0, 0, 1, 1], [], []>} : vector<16x16xf32>, vector<16x32xf32>, vector<16x32xf32> -> vector<16x32xf32>
    %c0_3 = arith.constant 0 : index
    %c0_4 = arith.constant 0 : index
    %3 = vector.load %arg3[%c0_3, %c0_4] : memref<1x32xf32, #tpu.memory_space<vmem>>, vector<1x32xf32>
    %4 = vector.broadcast %3 : vector<1x32xf32> to vector<16x32xf32>
    %5 = arith.addf %2, %4 : vector<16x32xf32>
    %c0_5 = arith.constant 0 : index
    %c0_6 = arith.constant 0 : index
    %6 = vector.load %arg1[%c0_5, %c0_6] : memref<16x64xf32, #tpu.memory_space<vmem>>, vector<16x64xf32>
    %c0_7 = arith.constant 0 : index
    %c0_8 = arith.constant 0 : index
    %7 = vector.load %arg8[%c0_7, %c0_8] : memref<16x64xf32, #tpu.memory_space<vmem>>, vector<16x64xf32>
    %c0_9 = arith.constant 0 : index
    %c0_10 = arith.constant 0 : index
    %8 = vector.load %arg9[%c0_9, %c0_10] : memref<64x32xf32, #tpu.memory_space<vmem>>, vector<64x32xf32>
    %c0_11 = arith.constant 0 : index
    %c0_12 = arith.constant 0 : index
    %c0_13 = arith.constant 0 : index
    %9 = vector.load %arg4[%c0_11, %c0_12, %c0_13] : memref<2x32x32xf32, #tpu.memory_space<vmem>>, vector<1x32x32xf32>
    %10 = vector.shape_cast %9 : vector<1x32x32xf32> to vector<32x32xf32>
    %c0_14 = arith.constant 0 : index
    %c0_15 = arith.constant 0 : index
    %c0_16 = arith.constant 0 : index
    %11 = vector.load %arg5[%c0_14, %c0_15, %c0_16] : memref<2x32x64xf32, #tpu.memory_space<vmem>>, vector<1x32x64xf32>
    %12 = vector.shape_cast %11 : vector<1x32x64xf32> to vector<32x64xf32>
    %c0_17 = arith.constant 0 : index
    %c0_18 = arith.constant 0 : index
    %c0_19 = arith.constant 0 : index
    %13 = vector.load %arg6[%c0_17, %c0_18, %c0_19] : memref<2x32x64xf32, #tpu.memory_space<vmem>>, vector<1x32x64xf32>
    %14 = vector.shape_cast %13 : vector<1x32x64xf32> to vector<32x64xf32>
    %c0_20 = arith.constant 0 : index
    %c0_21 = arith.constant 0 : index
    %c0_22 = arith.constant 0 : index
    %15 = vector.load %arg7[%c0_20, %c0_21, %c0_22] : memref<2x1x32xf32, #tpu.memory_space<vmem>>, vector<1x1x32xf32>
    %16 = vector.shape_cast %15 : vector<1x1x32xf32> to vector<1x32xf32>
    %cst_23 = arith.constant dense<0.000000e+00> : vector<16x32xf32>
    %17 = tpu.matmul %5, %10, %cst_23 {dimension_numbers = #tpu.dot_dimension_numbers<[1], [0], [0], [1], [0, 0, 1, 1], [], []>} : vector<16x32xf32>, vector<32x32xf32>, vector<16x32xf32> -> vector<16x32xf32>
    %cst_24 = arith.constant dense<0.000000e+00> : vector<16x64xf32>
    %18 = tpu.matmul %17, %12, %cst_24 {dimension_numbers = #tpu.dot_dimension_numbers<[1], [0], [0], [1], [0, 0, 1, 1], [], []>} : vector<16x32xf32>, vector<32x64xf32>, vector<16x64xf32> -> vector<16x64xf32>
    %cst_25 = arith.constant dense<0.000000e+00> : vector<16x64xf32>
    %19 = tpu.matmul %17, %14, %cst_25 {dimension_numbers = #tpu.dot_dimension_numbers<[1], [0], [0], [1], [0, 0, 1, 1], [], []>} : vector<16x32xf32>, vector<32x64xf32>, vector<16x64xf32> -> vector<16x64xf32>
    %20 = arith.mulf %7, %19 : vector<16x64xf32>
    %cst_26 = arith.constant dense<0.000000e+00> : vector<64xf32>
    %21 = vector.multi_reduction <add>, %20, %cst_26 [0] : vector<16x64xf32> to vector<64xf32>
    %22 = vector.shape_cast %21 : vector<64xf32> to vector<1x64xf32>
    %23 = vector.broadcast %22 : vector<1x64xf32> to vector<16x64xf32>
    %24 = arith.addf %18, %23 : vector<16x64xf32>
    %cst_27 = arith.constant 0.000000e+00 : f32
    %25 = vector.broadcast %cst_27 : f32 to vector<16x64xf32>
    %26 = arith.cmpf ogt, %24, %25 : vector<16x64xf32>
    %cst_28 = arith.constant 2.000000e-01 : f32
    %27 = vector.broadcast %cst_28 : f32 to vector<16x64xf32>
    %28 = arith.mulf %27, %24 : vector<16x64xf32>
    %29 = arith.select %26, %24, %28 : vector<16x64xi1>, vector<16x64xf32>
    %30 = arith.addf %29, %6 : vector<16x64xf32>
    %cst_29 = arith.constant dense<0xFF800000> : vector<16xf32>
    %31 = vector.multi_reduction <maximumf>, %30, %cst_29 [1] : vector<16x64xf32> to vector<16xf32>
    %32 = vector.shape_cast %31 : vector<16xf32> to vector<16x1xf32>
    %33 = vector.broadcast %32 : vector<16x1xf32> to vector<16x64xf32>
    %34 = arith.subf %30, %33 : vector<16x64xf32>
    %35 = math.exp %34 : vector<16x64xf32>
    %36 = tpu.concatenate %17, %17, %17, %17 in 0 : vector<16x32xf32>, vector<16x32xf32>, vector<16x32xf32>, vector<16x32xf32> -> vector<64x32xf32>
    %37 = arith.mulf %36, %8 : vector<64x32xf32>
    %cst_30 = arith.constant dense<0.000000e+00> : vector<16x32xf32>
    %38 = tpu.matmul %35, %37, %cst_30 {dimension_numbers = #tpu.dot_dimension_numbers<[1], [0], [0], [1], [0, 0, 1, 1], [], []>} : vector<16x64xf32>, vector<64x32xf32>, vector<16x32xf32> -> vector<16x32xf32>
    %cst_31 = arith.constant dense<0.000000e+00> : vector<16x32xf32>
    %39 = tpu.matmul %35, %8, %cst_31 {dimension_numbers = #tpu.dot_dimension_numbers<[1], [0], [0], [1], [0, 0, 1, 1], [], []>} : vector<16x64xf32>, vector<64x32xf32>, vector<16x32xf32> -> vector<16x32xf32>
    %40 = tpu.reciprocal %39 {approx = true} : vector<16x32xf32> -> vector<16x32xf32>
    %41 = arith.mulf %38, %40 : vector<16x32xf32>
    %42 = vector.broadcast %16 : vector<1x32xf32> to vector<16x32xf32>
    %43 = arith.addf %41, %42 : vector<16x32xf32>
    %cst_32 = arith.constant 0.000000e+00 : f32
    %44 = vector.broadcast %cst_32 : f32 to vector<16x32xf32>
    %45 = arith.cmpf ogt, %43, %44 : vector<16x32xf32>
    %cst_33 = arith.constant 0.000000e+00 : f32
    %46 = vector.broadcast %cst_33 : f32 to vector<16x32xf32>
    %47 = arith.minimumf %43, %46 : vector<16x32xf32>
    %48 = math.exp %47 : vector<16x32xf32>
    %cst_34 = arith.constant 1.000000e+00 : f32
    %49 = vector.broadcast %cst_34 : f32 to vector<16x32xf32>
    %50 = arith.subf %48, %49 : vector<16x32xf32>
    %51 = arith.select %45, %43, %50 : vector<16x32xi1>, vector<16x32xf32>
    %c1 = arith.constant 1 : index
    %c0_35 = arith.constant 0 : index
    %c0_36 = arith.constant 0 : index
    %52 = vector.load %arg4[%c1, %c0_35, %c0_36] : memref<2x32x32xf32, #tpu.memory_space<vmem>>, vector<1x32x32xf32>
    %53 = vector.shape_cast %52 : vector<1x32x32xf32> to vector<32x32xf32>
    %c1_37 = arith.constant 1 : index
    %c0_38 = arith.constant 0 : index
    %c0_39 = arith.constant 0 : index
    %54 = vector.load %arg5[%c1_37, %c0_38, %c0_39] : memref<2x32x64xf32, #tpu.memory_space<vmem>>, vector<1x32x64xf32>
    %55 = vector.shape_cast %54 : vector<1x32x64xf32> to vector<32x64xf32>
    %c1_40 = arith.constant 1 : index
    %c0_41 = arith.constant 0 : index
    %c0_42 = arith.constant 0 : index
    %56 = vector.load %arg6[%c1_40, %c0_41, %c0_42] : memref<2x32x64xf32, #tpu.memory_space<vmem>>, vector<1x32x64xf32>
    %57 = vector.shape_cast %56 : vector<1x32x64xf32> to vector<32x64xf32>
    %c1_43 = arith.constant 1 : index
    %c0_44 = arith.constant 0 : index
    %c0_45 = arith.constant 0 : index
    %58 = vector.load %arg7[%c1_43, %c0_44, %c0_45] : memref<2x1x32xf32, #tpu.memory_space<vmem>>, vector<1x1x32xf32>
    %59 = vector.shape_cast %58 : vector<1x1x32xf32> to vector<1x32xf32>
    %cst_46 = arith.constant dense<0.000000e+00> : vector<16x32xf32>
    %60 = tpu.matmul %51, %53, %cst_46 {dimension_numbers = #tpu.dot_dimension_numbers<[1], [0], [0], [1], [0, 0, 1, 1], [], []>} : vector<16x32xf32>, vector<32x32xf32>, vector<16x32xf32> -> vector<16x32xf32>
    %cst_47 = arith.constant dense<0.000000e+00> : vector<16x64xf32>
    %61 = tpu.matmul %60, %55, %cst_47 {dimension_numbers = #tpu.dot_dimension_numbers<[1], [0], [0], [1], [0, 0, 1, 1], [], []>} : vector<16x32xf32>, vector<32x64xf32>, vector<16x64xf32> -> vector<16x64xf32>
    %cst_48 = arith.constant dense<0.000000e+00> : vector<16x64xf32>
    %62 = tpu.matmul %60, %57, %cst_48 {dimension_numbers = #tpu.dot_dimension_numbers<[1], [0], [0], [1], [0, 0, 1, 1], [], []>} : vector<16x32xf32>, vector<32x64xf32>, vector<16x64xf32> -> vector<16x64xf32>
    %63 = arith.mulf %7, %62 : vector<16x64xf32>
    %cst_49 = arith.constant dense<0.000000e+00> : vector<64xf32>
    %64 = vector.multi_reduction <add>, %63, %cst_49 [0] : vector<16x64xf32> to vector<64xf32>
    %65 = vector.shape_cast %64 : vector<64xf32> to vector<1x64xf32>
    %66 = vector.broadcast %65 : vector<1x64xf32> to vector<16x64xf32>
    %67 = arith.addf %61, %66 : vector<16x64xf32>
    %cst_50 = arith.constant 0.000000e+00 : f32
    %68 = vector.broadcast %cst_50 : f32 to vector<16x64xf32>
    %69 = arith.cmpf ogt, %67, %68 : vector<16x64xf32>
    %cst_51 = arith.constant 2.000000e-01 : f32
    %70 = vector.broadcast %cst_51 : f32 to vector<16x64xf32>
    %71 = arith.mulf %70, %67 : vector<16x64xf32>
    %72 = arith.select %69, %67, %71 : vector<16x64xi1>, vector<16x64xf32>
    %73 = arith.addf %72, %6 : vector<16x64xf32>
    %cst_52 = arith.constant dense<0xFF800000> : vector<16xf32>
    %74 = vector.multi_reduction <maximumf>, %73, %cst_52 [1] : vector<16x64xf32> to vector<16xf32>
    %75 = vector.shape_cast %74 : vector<16xf32> to vector<16x1xf32>
    %76 = vector.broadcast %75 : vector<16x1xf32> to vector<16x64xf32>
    %77 = arith.subf %73, %76 : vector<16x64xf32>
    %78 = math.exp %77 : vector<16x64xf32>
    %79 = tpu.concatenate %60, %60, %60, %60 in 0 : vector<16x32xf32>, vector<16x32xf32>, vector<16x32xf32>, vector<16x32xf32> -> vector<64x32xf32>
    %80 = arith.mulf %79, %8 : vector<64x32xf32>
    %cst_53 = arith.constant dense<0.000000e+00> : vector<16x32xf32>
    %81 = tpu.matmul %78, %80, %cst_53 {dimension_numbers = #tpu.dot_dimension_numbers<[1], [0], [0], [1], [0, 0, 1, 1], [], []>} : vector<16x64xf32>, vector<64x32xf32>, vector<16x32xf32> -> vector<16x32xf32>
    %cst_54 = arith.constant dense<0.000000e+00> : vector<16x32xf32>
    %82 = tpu.matmul %78, %8, %cst_54 {dimension_numbers = #tpu.dot_dimension_numbers<[1], [0], [0], [1], [0, 0, 1, 1], [], []>} : vector<16x64xf32>, vector<64x32xf32>, vector<16x32xf32> -> vector<16x32xf32>
    %83 = tpu.reciprocal %82 {approx = true} : vector<16x32xf32> -> vector<16x32xf32>
    %84 = arith.mulf %81, %83 : vector<16x32xf32>
    %85 = vector.broadcast %59 : vector<1x32xf32> to vector<16x32xf32>
    %86 = arith.addf %84, %85 : vector<16x32xf32>
    %cst_55 = arith.constant 0.000000e+00 : f32
    %87 = vector.broadcast %cst_55 : f32 to vector<16x32xf32>
    %88 = arith.cmpf ogt, %86, %87 : vector<16x32xf32>
    %cst_56 = arith.constant 0.000000e+00 : f32
    %89 = vector.broadcast %cst_56 : f32 to vector<16x32xf32>
    %90 = arith.minimumf %86, %89 : vector<16x32xf32>
    %91 = math.exp %90 : vector<16x32xf32>
    %cst_57 = arith.constant 1.000000e+00 : f32
    %92 = vector.broadcast %cst_57 : f32 to vector<16x32xf32>
    %93 = arith.subf %91, %92 : vector<16x32xf32>
    %94 = arith.select %88, %86, %93 : vector<16x32xi1>, vector<16x32xf32>
    %c0_58 = arith.constant 0 : index
    %c0_59 = arith.constant 0 : index
    %95 = vector.load %arg10[%c0_58, %c0_59] : memref<2x16xf32, #tpu.memory_space<vmem>>, vector<2x16xf32>
    %cst_60 = arith.constant dense<0.000000e+00> : vector<2x32xf32>
    %96 = tpu.matmul %95, %94, %cst_60 {dimension_numbers = #tpu.dot_dimension_numbers<[1], [0], [0], [1], [0, 0, 1, 1], [], []>} : vector<2x16xf32>, vector<16x32xf32>, vector<2x32xf32> -> vector<2x32xf32>
    %c0_61 = arith.constant 0 : index
    %c0_62 = arith.constant 0 : index
    %97 = vector.load %arg11[%c0_61, %c0_62] : memref<2x16xf32, #tpu.memory_space<vmem>>, vector<2x16xf32>
    %cst_63 = arith.constant dense<0.000000e+00> : vector<2x32xf32>
    %98 = tpu.matmul %97, %94, %cst_63 {dimension_numbers = #tpu.dot_dimension_numbers<[1], [0], [0], [1], [0, 0, 1, 1], [], []>} : vector<2x16xf32>, vector<16x32xf32>, vector<2x32xf32> -> vector<2x32xf32>
    %c0_64 = arith.constant 0 : index
    %c0_65 = arith.constant 0 : index
    %99 = vector.load %arg12[%c0_64, %c0_65] : memref<32x3xf32, #tpu.memory_space<vmem>>, vector<32x3xf32>
    %cst_66 = arith.constant dense<0.000000e+00> : vector<2x3xf32>
    %100 = tpu.matmul %96, %99, %cst_66 {dimension_numbers = #tpu.dot_dimension_numbers<[1], [0], [0], [1], [0, 0, 1, 1], [], []>} : vector<2x32xf32>, vector<32x3xf32>, vector<2x3xf32> -> vector<2x3xf32>
    %c0_67 = arith.constant 0 : index
    %c0_68 = arith.constant 0 : index
    %101 = vector.load %arg13[%c0_67, %c0_68] : memref<32x3xf32, #tpu.memory_space<vmem>>, vector<32x3xf32>
    %cst_69 = arith.constant dense<0.000000e+00> : vector<2x3xf32>
    %102 = tpu.matmul %98, %101, %cst_69 {dimension_numbers = #tpu.dot_dimension_numbers<[1], [0], [0], [1], [0, 0, 1, 1], [], []>} : vector<2x32xf32>, vector<32x3xf32>, vector<2x3xf32> -> vector<2x3xf32>
    %103 = arith.addf %100, %102 : vector<2x3xf32>
    %c0_70 = arith.constant 0 : index
    %c0_71 = arith.constant 0 : index
    %104 = vector.load %arg14[%c0_70, %c0_71] : memref<1x3xf32, #tpu.memory_space<vmem>>, vector<1x3xf32>
    %105 = vector.broadcast %104 : vector<1x3xf32> to vector<2x3xf32>
    %106 = arith.addf %103, %105 : vector<2x3xf32>
    %c0_72 = arith.constant 0 : index
    %c0_73 = arith.constant 0 : index
    %107 = vector.load %arg15[%c0_72, %c0_73] : memref<2x3xf32, #tpu.memory_space<vmem>>, vector<2x3xf32>
    tpu.vector_store %arg15[%c0_72, %c0_73], %106 {strides = array<i32>} : memref<2x3xf32, #tpu.memory_space<vmem>>, vector<2x3xf32>,
    return
  }
}

</mosaic_0001>

<llo_original>
// kernel: tpu_custom_call.1
$region0: #{tpu_custom_call.1}
  #allocation0 [shape = 'u32[]', space=smem, size = 0x4, offset = 0x4, fixed_abs, tag = 'smem constant byte address 0x4 - core index']
  #allocation1 [shape = 'u32[72,128]{1,0:T(1,128)}', space=vmem, size = 0x9000, scoped, tag = 'internal scratch']
  %s0 = inlined_call_operand.hbm [shape: f32[16,16], index: 0, kind: input, shape index: {}]
  %s1 = inlined_call_operand.hbm [shape: f32[16,64], index: 1, kind: input, shape index: {}]
  %s2 = inlined_call_operand.hbm [shape: f32[16,32], index: 2, kind: input, shape index: {}]
  %s3 = inlined_call_operand.vmem [shape: f32[1,32], index: 3, kind: input, shape index: {}]
  %s4 = inlined_call_operand.vmem [shape: f32[2,32,32], index: 4, kind: input, shape index: {}]
  %s5 = inlined_call_operand.vmem [shape: f32[2,32,64], index: 5, kind: input, shape index: {}]
  %s6 = inlined_call_operand.hbm [shape: f32[2,32,64], index: 6, kind: input, shape index: {}]
  %s7 = inlined_call_operand.vmem [shape: f32[2,1,32], index: 7, kind: input, shape index: {}]
  %s8 = inlined_call_operand.hbm [shape: f32[16,64], index: 8, kind: input, shape index: {}]
  %s9 = inlined_call_operand.vmem [shape: f32[64,32], index: 9, kind: input, shape index: {}]
  %s10 = inlined_call_operand.vmem [shape: f32[2,16], index: 10, kind: input, shape index: {}]
  %s11 = inlined_call_operand.vmem [shape: f32[2,16], index: 11, kind: input, shape index: {}]
  %s12 = inlined_call_operand.vmem [shape: f32[32,3], index: 12, kind: input, shape index: {}]
  %s13 = inlined_call_operand.vmem [shape: f32[32,3], index: 13, kind: input, shape index: {}]
  %s14 = inlined_call_operand.vmem [shape: f32[1,3], index: 14, kind: input, shape index: {}]
  %s15 = inlined_call_operand.hbm [shape: f32[2,3], index: 15, kind: output, shape index: {}]
  %s16 = sld [smem:[#allocation0]]
  $region90: #{tpu_custom_call.1} parent=0
    _
  %s18 = ssub.s32 1, %s16
  %s19 = scalar_select 0, %s18, %s16
  $region1: #{tpu_custom_call.1} parent=0
    #allocation2 [shape = 'u8[8192]{0}', space=vmem, size = 0x2000, scoped, tag = 'input window, operand 0, single buffered']
    #allocation3 [shape = 's32[1]{0}', space=sflag, size = 0x4, scoped, tag = 'scoped memory for tpu_custom_call.1']
    #allocation4 [shape = 's32[1]{0}', space=sflag, size = 0x4, scoped, tag = 'scoped memory for tpu_custom_call.1']
    #allocation5 [shape = 'u8[8192]{0}', space=vmem, size = 0x2000, scoped, tag = 'input window, operand 1, single buffered']
    #allocation6 [shape = 's32[1]{0}', space=sflag, size = 0x4, scoped, tag = 'scoped memory for tpu_custom_call.1']
    #allocation7 [shape = 'u8[8192]{0}', space=vmem, size = 0x2000, scoped, tag = 'input window, operand 2, single buffered']
    #allocation8 [shape = 'u8[32768]{0}', space=vmem, size = 0x8000, scoped, tag = 'input window, operand 6, single buffered']
    #allocation9 [shape = 's32[1]{0}', space=sflag, size = 0x4, scoped, tag = 'scoped memory for tpu_custom_call.1']
    #allocation10 [shape = 'u8[8192]{0}', space=vmem, size = 0x2000, scoped, tag = 'input window, operand 8, single buffered']
    #allocation11 [shape = 'u8[1024]{0}', space=vmem, size = 0x400, scoped, tag = 'output window, operand 0, single buffered']
    %20 = vsyncpa [#allocation3], 0
    %21 = vsyncpa [#allocation6], 0
    %22 = vsyncpa [#allocation9], 0
    %23 = vsyncpa [#allocation4], 0
    // Predicated region
    $region2: #{tpu_custom_call.1} parent=1 // pred_check
      _
    $region3: #{tpu_custom_call.1} parent=1 // pred_check_branch
      %25 = sbr.rel (0) target = $region5
    $region4: #{tpu_custom_call.1} parent=1 // pred_region
      %27 = vsyncadd [#allocation3], 0
      %s28 = sshll.u32 %s0, 4
      %s29 = int_to_ptr.hbm [resolvable:$true] %s28
      %s30 = sshll.u32 [#allocation2], 4
      %s31 = int_to_ptr.vmem [resolvable:$true] %s30
      %36 = dma.hbm_to_vmem [thread:$0]  %s29, 256, %s31, [#allocation3], 128, 128, 8
    $region5: #{tpu_custom_call.1} parent=1 // pred_fallthru
      _
    // Predicated region
    $region6: #{tpu_custom_call.1} parent=1 // pred_check
      _
    $region7: #{tpu_custom_call.1} parent=1 // pred_check_branch
      %38 = sbr.rel (0) target = $region9
    $region8: #{tpu_custom_call.1} parent=1 // pred_region
      %40 = vsyncadd [#allocation6], 0
      %s41 = sshll.u32 %s1, 4
      %s42 = int_to_ptr.hbm [resolvable:$true] %s41
      %s43 = sshll.u32 [#allocation5], 4
      %s44 = int_to_ptr.vmem [resolvable:$true] %s43
      %49 = dma.hbm_to_vmem [thread:$0]  %s42, 256, %s44, [#allocation6], 128, 128, 8
    $region9: #{tpu_custom_call.1} parent=1 // pred_fallthru
      _
    // Predicated region
    $region10: #{tpu_custom_call.1} parent=1 // pred_check
      _
    $region11: #{tpu_custom_call.1} parent=1 // pred_check_branch
      %51 = sbr.rel (0) target = $region13
    $region12: #{tpu_custom_call.1} parent=1 // pred_region
      %53 = vsyncadd [#allocation6], 0
      %s54 = sshll.u32 %s2, 4
      %s55 = int_to_ptr.hbm [resolvable:$true] %s54
      %s56 = sshll.u32 [#allocation7], 4
      %s57 = int_to_ptr.vmem [resolvable:$true] %s56
      %62 = dma.hbm_to_vmem [thread:$0]  %s55, 256, %s57, [#allocation6], 128, 128, 8
    $region13: #{tpu_custom_call.1} parent=1 // pred_fallthru
      _
    // Predicated region
    $region14: #{tpu_custom_call.1} parent=1 // pred_check
      _
    $region15: #{tpu_custom_call.1} parent=1 // pred_check_branch
      %64 = sbr.rel (0) target = $region17
    $region16: #{tpu_custom_call.1} parent=1 // pred_region
      _
    $region17: #{tpu_custom_call.1} parent=1 // pred_fallthru
      _
    // Predicated region
    $region18: #{tpu_custom_call.1} parent=1 // pred_check
      _
    $region19: #{tpu_custom_call.1} parent=1 // pred_check_branch
      %66 = sbr.rel (0) target = $region21
    $region20: #{tpu_custom_call.1} parent=1 // pred_region
      _
    $region21: #{tpu_custom_call.1} parent=1 // pred_fallthru
      _
    // Predicated region
    $region22: #{tpu_custom_call.1} parent=1 // pred_check
      _
    $region23: #{tpu_custom_call.1} parent=1 // pred_check_branch
      %68 = sbr.rel (0) target = $region25
    $region24: #{tpu_custom_call.1} parent=1 // pred_region
      _
    $region25: #{tpu_custom_call.1} parent=1 // pred_fallthru
      _
    // Predicated region
    $region26: #{tpu_custom_call.1} parent=1 // pred_check
      _
    $region27: #{tpu_custom_call.1} parent=1 // pred_check_branch
      %70 = sbr.rel (0) target = $region29
    $region28: #{tpu_custom_call.1} parent=1 // pred_region
      %72 = vsyncadd [#allocation9], 0
      %s73 = sshll.u32 %s6, 4
      %s74 = int_to_ptr.hbm [resolvable:$true] %s73
      %s75 = sshll.u32 [#allocation8], 4
      %s76 = int_to_ptr.vmem [resolvable:$true] %s75
      %81 = dma.hbm_to_vmem [thread:$0]  %s74, 1024, %s76, [#allocation9], 128, 128, 8
    $region29: #{tpu_custom_call.1} parent=1 // pred_fallthru
      _
    // Predicated region
    $region30: #{tpu_custom_call.1} parent=1 // pred_check
      _
    $region31: #{tpu_custom_call.1} parent=1 // pred_check_branch
      %83 = sbr.rel (0) target = $region33
    $region32: #{tpu_custom_call.1} parent=1 // pred_region
      _
    $region33: #{tpu_custom_call.1} parent=1 // pred_fallthru
      _
    // Predicated region
    $region34: #{tpu_custom_call.1} parent=1 // pred_check
      _
    $region35: #{tpu_custom_call.1} parent=1 // pred_check_branch
      %85 = sbr.rel (0) target = $region37
    $region36: #{tpu_custom_call.1} parent=1 // pred_region
      %87 = vsyncadd [#allocation9], 0
      %s88 = sshll.u32 %s8, 4
      %s89 = int_to_ptr.hbm [resolvable:$true] %s88
      %s90 = sshll.u32 [#allocation10], 4
      %s91 = int_to_ptr.vmem [resolvable:$true] %s90
      %96 = dma.hbm_to_vmem [thread:$0]  %s89, 256, %s91, [#allocation9], 128, 128, 8
    $region37: #{tpu_custom_call.1} parent=1 // pred_fallthru
      _
    // Predicated region
    $region38: #{tpu_custom_call.1} parent=1 // pred_check
      _
    $region39: #{tpu_custom_call.1} parent=1 // pred_check_branch
      %98 = sbr.rel (0) target = $region41
    $region40: #{tpu_custom_call.1} parent=1 // pred_region
      _
    $region41: #{tpu_custom_call.1} parent=1 // pred_fallthru
      _
    // Predicated region
    $region42: #{tpu_custom_call.1} parent=1 // pred_check
      _
    $region43: #{tpu_custom_call.1} parent=1 // pred_check_branch
      %100 = sbr.rel (0) target = $region45
    $region44: #{tpu_custom_call.1} parent=1 // pred_region
      _
    $region45: #{tpu_custom_call.1} parent=1 // pred_fallthru
      _
    // Predicated region
    $region46: #{tpu_custom_call.1} parent=1 // pred_check
      _
    $region47: #{tpu_custom_call.1} parent=1 // pred_check_branch
      %102 = sbr.rel (0) target = $region49
    $region48: #{tpu_custom_call.1} parent=1 // pred_region
      _
    $region49: #{tpu_custom_call.1} parent=1 // pred_fallthru
      _
    // Predicated region
    $region50: #{tpu_custom_call.1} parent=1 // pred_check
      _
    $region51: #{tpu_custom_call.1} parent=1 // pred_check_branch
      %104 = sbr.rel (0) target = $region53
    $region52: #{tpu_custom_call.1} parent=1 // pred_region
      _
    $region53: #{tpu_custom_call.1} parent=1 // pred_fallthru
      _
    // Predicated region
    $region54: #{tpu_custom_call.1} parent=1 // pred_check
      _
    $region55: #{tpu_custom_call.1} parent=1 // pred_check_branch
      %106 = sbr.rel (0) target = $region57
    $region56: #{tpu_custom_call.1} parent=1 // pred_region
      _
    $region57: #{tpu_custom_call.1} parent=1 // pred_fallthru
      _
    // Predicated region
    $region58: #{tpu_custom_call.1} parent=1 // pred_check
      _
    $region59: #{tpu_custom_call.1} parent=1 // pred_check_branch
      %108 = sbr.rel (0) target = $region61
    $region60: #{tpu_custom_call.1} parent=1 // pred_region
      _
    $region61: #{tpu_custom_call.1} parent=1 // pred_fallthru
      _
    // Predicated region
    $region62: #{tpu_custom_call.1} parent=1 // pred_check
      _
    $region63: #{tpu_custom_call.1} parent=1 // pred_check_branch
      %110 = sbr.rel (0) target = $region65
    $region64: #{tpu_custom_call.1} parent=1 // pred_region
      %112 = dma.done [#allocation3], 256
    $region65: #{tpu_custom_call.1} parent=1 // pred_fallthru
      _
    // Predicated region
    $region66: #{tpu_custom_call.1} parent=1 // pred_check
      _
    $region67: #{tpu_custom_call.1} parent=1 // pred_check_branch
      %114 = sbr.rel (0) target = $region69
    $region68: #{tpu_custom_call.1} parent=1 // pred_region
      %116 = dma.done [#allocation6], 256
    $region69: #{tpu_custom_call.1} parent=1 // pred_fallthru
      _
    // Predicated region
    $region70: #{tpu_custom_call.1} parent=1 // pred_check
      _
    $region71: #{tpu_custom_call.1} parent=1 // pred_check_branch
      %118 = sbr.rel (0) target = $region73
    $region72: #{tpu_custom_call.1} parent=1 // pred_region
      %120 = dma.done [#allocation6], 256
    $region73: #{tpu_custom_call.1} parent=1 // pred_fallthru
      _
    // Predicated region
    $region74: #{tpu_custom_call.1} parent=1 // pred_check
      _
    $region75: #{tpu_custom_call.1} parent=1 // pred_check_branch
      %122 = sbr.rel (0) target = $region77
    $region76: #{tpu_custom_call.1} parent=1 // pred_region
      %124 = dma.done [#allocation9], 1024
    $region77: #{tpu_custom_call.1} parent=1 // pred_fallthru
      _
    // Predicated region
    $region78: #{tpu_custom_call.1} parent=1 // pred_check
      _
    $region79: #{tpu_custom_call.1} parent=1 // pred_check_branch
      %126 = sbr.rel (0) target = $region81
    $region80: #{tpu_custom_call.1} parent=1 // pred_region
      %128 = dma.done [#allocation9], 256
    $region81: #{tpu_custom_call.1} parent=1 // pred_fallthru
      _
    %v129 = vld [vmem:[#allocation2] sm:$0xff]
    %v130 = vld [vmem:[#allocation2 + $0x8] sm:$0xff]
    %v131 = vld [vmem:[#allocation7] sm:$0xff]
    %v132 = vld [vmem:[#allocation7 + $0x8] sm:$0xff]
    %v133 = vld [vmem:[%s3] sm:$0x1]
    %v135 = vperm.slane %v133, 0
    %vm137 = vcmask 130048
    %v139 = vsel %vm137, %v129, 0
    %v142 = vsel %vm137, %v130, 0
    %144 = vmatpush.msra.mxu0 0.0
    %145 = vmatpush.msra.mxu0 0.0
    %146 = vmatpush.msra.mxu0 0.0
    %147 = vmatpush.msra.mxu0 0.0
    %148 = vmatpush.msra.mxu0 0.0
    %149 = vmatpush.msra.mxu0 0.0
    %150 = vmatpush.msra.mxu0 0.0
    %151 = vmatpush.msra.mxu0 0.0
    %152 = vmatpush.msra.mxu0 0.0
    %153 = vmatpush.msra.mxu0 0.0
    %154 = vmatpush.msra.mxu0 0.0
    %155 = vmatpush.msra.mxu0 0.0
    %156 = vmatpush.msra.mxu0 0.0
    %157 = vmatpush.msra.mxu0 0.0
    %158 = vmatpush.msra.mxu0 %v132
    %159 = vmatpush.msra.mxu0 %v131
    %160 = vmatmul.f32.gmra.mxu0 %v139
    %v161 = vpop.f32.mrf.mxu0
    %v162 = vadd.f32 %v135, %v161
    %163 = vmatmul.f32.gmra.mxu0 %v142
    %v164 = vpop.f32.mrf.mxu0
    %v165 = vadd.f32 %v135, %v164
    %166 = vdwg.mxu0
    %v167 = vld [vmem:[#allocation5] sm:$0xff]
    %v168 = vld [vmem:[#allocation5 + $0x8] sm:$0xff]
    %v169 = vld [vmem:[#allocation10] sm:$0xff]
    %v170 = vld [vmem:[#allocation10 + $0x8] sm:$0xff]
    %v171 = vld [vmem:[%s9] sm:$0xff]
    %v172 = vld [vmem:[%s9 + $0x8] sm:$0xff]
    %v173 = vld [vmem:[%s9 + $0x10] sm:$0xff]
    %v174 = vld [vmem:[%s9 + $0x18] sm:$0xff]
    %v175 = vld [vmem:[%s9 + $0x20] sm:$0xff]
    %v176 = vld [vmem:[%s9 + $0x28] sm:$0xff]
    %v177 = vld [vmem:[%s9 + $0x30] sm:$0xff]
    %v178 = vld [vmem:[%s9 + $0x38] sm:$0xff]
    %v179 = vld [vmem:[%s4] sm:$0xff]
    %v180 = vld [vmem:[%s4 + $0x8] sm:$0xff]
    %v181 = vld [vmem:[%s4 + $0x10] sm:$0xff]
    %v182 = vld [vmem:[%s4 + $0x18] sm:$0xff]
    %v183 = vld [vmem:[%s5] sm:$0xff]
    %v184 = vld [vmem:[%s5 + $0x8] sm:$0xff]
    %v185 = vld [vmem:[%s5 + $0x10] sm:$0xff]
    %v186 = vld [vmem:[%s5 + $0x18] sm:$0xff]
    %v187 = vld [vmem:[#allocation8] sm:$0xff]
    %v188 = vld [vmem:[#allocation8 + $0x8] sm:$0xff]
    %v189 = vld [vmem:[#allocation8 + $0x10] sm:$0xff]
    %v190 = vld [vmem:[#allocation8 + $0x18] sm:$0xff]
    %v191 = vld [vmem:[%s7] sm:$0x1]
    %vm192 = vcmask 261120
    %v194 = vsel %vm192, %v162, 0
    %v197 = vsel %vm192, %v165, 0
    %199 = vmatpush.msra.mxu0 0.0
    %200 = vmatpush.msra.mxu0 0.0
    %201 = vmatpush.msra.mxu0 0.0
    %202 = vmatpush.msra.mxu0 0.0
    %203 = vmatpush.msra.mxu0 0.0
    %204 = vmatpush.msra.mxu0 0.0
    %205 = vmatpush.msra.mxu0 0.0
    %206 = vmatpush.msra.mxu0 0.0
    %207 = vmatpush.msra.mxu0 0.0
    %208 = vmatpush.msra.mxu0 0.0
    %209 = vmatpush.msra.mxu0 0.0
    %210 = vmatpush.msra.mxu0 0.0
    %211 = vmatpush.msra.mxu0 %v182
    %212 = vmatpush.msra.mxu0 %v181
    %213 = vmatpush.msra.mxu0 %v180
    %214 = vmatpush.msra.mxu0 %v179
    %215 = vmatmul.f32.gmra.mxu0 %v194
    %v216 = vpop.f32.mrf.mxu0
    %v217 = vadd.f32 0.0, %v216
    %218 = vmatmul.f32.gmra.mxu0 %v197
    %v219 = vpop.f32.mrf.mxu0
    %v220 = vadd.f32 0.0, %v219
    %221 = vdwg.mxu0
    %v223 = vsel %vm192, %v217, 0
    %v226 = vsel %vm192, %v220, 0
    %228 = vmatpush.msra.mxu0 0.0
    %229 = vmatpush.msra.mxu0 0.0
    %230 = vmatpush.msra.mxu0 0.0
    %231 = vmatpush.msra.mxu0 0.0
    %232 = vmatpush.msra.mxu0 0.0
    %233 = vmatpush.msra.mxu0 0.0
    %234 = vmatpush.msra.mxu0 0.0
    %235 = vmatpush.msra.mxu0 0.0
    %236 = vmatpush.msra.mxu0 0.0
    %237 = vmatpush.msra.mxu0 0.0
    %238 = vmatpush.msra.mxu0 0.0
    %239 = vmatpush.msra.mxu0 0.0
    %240 = vmatpush.msra.mxu0 %v190
    %241 = vmatpush.msra.mxu0 %v189
    %242 = vmatpush.msra.mxu0 %v188
    %243 = vmatpush.msra.mxu0 %v187
    %244 = vmatmul.f32.gmra.mxu0 %v223
    %v245 = vpop.f32.mrf.mxu0
    %v246 = vadd.f32 0.0, %v245
    %247 = vmatmul.f32.gmra.mxu0 %v226
    %v248 = vpop.f32.mrf.mxu0
    %v249 = vadd.f32 0.0, %v248
    %250 = vdwg.mxu0
    %v251 = vmul.f32 %v169, %v246
    %v252 = vmul.f32 %v170, %v249
    %vm253 = vcmask 523264
    %v254 = vsel %vm253, %v251, 0.0
    %v255 = vsel %vm253, %v252, 0.0
    %v256 = vadd.f32 %v254, %v255
    %v257 = vrot.slane %v256, 4
    %v258 = vadd.f32 %v256, %v257
    %v259 = vrot.slane %v258, 2
    %v260 = vadd.f32 %v258, %v259
    %v261 = vrot.slane %v260, 1
    %v262 = vadd.f32 %v260, %v261
    %263 = vmatpush.msra.mxu0 0.0
    %264 = vmatpush.msra.mxu0 0.0
    %265 = vmatpush.msra.mxu0 0.0
    %266 = vmatpush.msra.mxu0 0.0
    %267 = vmatpush.msra.mxu0 0.0
    %268 = vmatpush.msra.mxu0 0.0
    %269 = vmatpush.msra.mxu0 0.0
    %270 = vmatpush.msra.mxu0 0.0
    %271 = vmatpush.msra.mxu0 0.0
    %272 = vmatpush.msra.mxu0 0.0
    %273 = vmatpush.msra.mxu0 0.0
    %274 = vmatpush.msra.mxu0 0.0
    %275 = vmatpush.msra.mxu0 %v186
    %276 = vmatpush.msra.mxu0 %v185
    %277 = vmatpush.msra.mxu0 %v184
    %278 = vmatpush.msra.mxu0 %v183
    %279 = vmatmul.f32.gmra.mxu0 %v223
    %v280 = vpop.f32.mrf.mxu0
    %v281 = vadd.f32 %v262, %v280
    %282 = vmatmul.f32.gmra.mxu0 %v226
    %v283 = vpop.f32.mrf.mxu0
    %v284 = vadd.f32 %v262, %v283
    %285 = vdwg.mxu0
    %vm286 = vcmp.gt.f32.partialorder %v281, 0.0
    %vm287 = vcmp.gt.f32.partialorder %v284, 0.0
    %v288 = vmul.f32 %v281, 0.2
    %v289 = vmul.f32 %v284, 0.2
    %v290 = vsel %vm286, %v281, %v288
    %v291 = vsel %vm287, %v284, %v289
    %v292 = vadd.f32 %v290, %v167
    %v293 = vadd.f32 %v291, %v168
    %v294 = vsel %vm253, %v292, -inf
    %295 = vmax.xlane.f32.xlu0 %v294
    %v296 = vpop.xlane.xlu0 %295
    %v297 = vsel %vm253, %v293, -inf
    %298 = vmax.xlane.f32.xlu0 %v297
    %v299 = vpop.xlane.xlu0 %298
    %v300 = vsub.f32 %v292, %v296
    %v301 = vsub.f32 %v293, %v299
    %v302 = vmul.f32 %v300, 1.442695
    %v303 = vpow.pop %v302
    %v304 = vmul.f32 %v301, 1.442695
    %v305 = vpow.pop %v304
    %v306 = vmul.f32 %v217, %v171
    %v307 = vmul.f32 %v220, %v172
    %v308 = vmul.f32 %v217, %v173
    %v309 = vmul.f32 %v220, %v174
    %v310 = vmul.f32 %v217, %v175
    %v311 = vmul.f32 %v220, %v176
    %v312 = vmul.f32 %v217, %v177
    %v313 = vmul.f32 %v220, %v178
    %v315 = vsel %vm253, %v303, 0
    %v318 = vsel %vm253, %v305, 0
    %320 = vmatpush.msra.mxu0 0.0
    %321 = vmatpush.msra.mxu0 0.0
    %322 = vmatpush.msra.mxu0 0.0
    %323 = vmatpush.msra.mxu0 0.0
    %324 = vmatpush.msra.mxu0 0.0
    %325 = vmatpush.msra.mxu0 0.0
    %326 = vmatpush.msra.mxu0 0.0
    %327 = vmatpush.msra.mxu0 0.0
    %328 = vmatpush.msra.mxu0 %v313
    %329 = vmatpush.msra.mxu0 %v312
    %330 = vmatpush.msra.mxu0 %v311
    %331 = vmatpush.msra.mxu0 %v310
    %332 = vmatpush.msra.mxu0 %v309
    %333 = vmatpush.msra.mxu0 %v308
    %334 = vmatpush.msra.mxu0 %v307
    %335 = vmatpush.msra.mxu0 %v306
    %336 = vmatmul.f32.gmra.mxu0 %v315
    %v337 = vpop.f32.mrf.mxu0
    %v338 = vadd.f32 0.0, %v337
    %339 = vmatmul.f32.gmra.mxu0 %v318
    %v340 = vpop.f32.mrf.mxu0
    %v341 = vadd.f32 0.0, %v340
    %342 = vdwg.mxu0
    %343 = vmatpush.msra.mxu0 0.0
    %344 = vmatpush.msra.mxu0 0.0
    %345 = vmatpush.msra.mxu0 0.0
    %346 = vmatpush.msra.mxu0 0.0
    %347 = vmatpush.msra.mxu0 0.0
    %348 = vmatpush.msra.mxu0 0.0
    %349 = vmatpush.msra.mxu0 0.0
    %350 = vmatpush.msra.mxu0 0.0
    %351 = vmatpush.msra.mxu0 %v178
    %352 = vmatpush.msra.mxu0 %v177
    %353 = vmatpush.msra.mxu0 %v176
    %354 = vmatpush.msra.mxu0 %v175
    %355 = vmatpush.msra.mxu0 %v174
    %356 = vmatpush.msra.mxu0 %v173
    %357 = vmatpush.msra.mxu0 %v172
    %358 = vmatpush.msra.mxu0 %v171
    %359 = vmatmul.f32.gmra.mxu0 %v315
    %v360 = vpop.f32.mrf.mxu0
    %v361 = vadd.f32 0.0, %v360
    %362 = vmatmul.f32.gmra.mxu0 %v318
    %v363 = vpop.f32.mrf.mxu0
    %v364 = vadd.f32 0.0, %v363
    %365 = vdwg.mxu0
    %v366 = vrcp.pop %v361
    %v367 = vrcp.pop %v364
    %v368 = vmul.f32 %v338, %v366
    %v369 = vmul.f32 %v341, %v367
    %v371 = vperm.slane %v191, 0
    %v373 = vadd.f32 %v368, %v371
    %v374 = vadd.f32 %v369, %v371
    %vm375 = vcmp.gt.f32.partialorder %v373, 0.0
    %vm376 = vcmp.gt.f32.partialorder %v374, 0.0
    %v377 = vmin.f32 %v373, 0.0
    %v378 = vmin.f32 %v374, 0.0
    %v379 = vmul.f32 %v377, 1.442695
    %v380 = vpow.pop %v379
    %v381 = vmul.f32 %v378, 1.442695
    %v382 = vpow.pop %v381
    %v383 = vsub.f32 %v380, 1.0
    %v384 = vsub.f32 %v382, 1.0
    %v385 = vsel %vm375, %v373, %v383
    %v386 = vsel %vm376, %v374, %v384
    %s387 = scalar_lea.vmem %s4, 32
    %v388 = vld [vmem:[%s387] sm:$0xff]
    %v389 = vld [vmem:[%s387 + $0x8] sm:$0xff]
    %v390 = vld [vmem:[%s387 + $0x10] sm:$0xff]
    %v391 = vld [vmem:[%s387 + $0x18] sm:$0xff]
    %s392 = scalar_lea.vmem %s5, 32
    %v393 = vld [vmem:[%s392] sm:$0xff]
    %v394 = vld [vmem:[%s392 + $0x8] sm:$0xff]
    %v395 = vld [vmem:[%s392 + $0x10] sm:$0xff]
    %v396 = vld [vmem:[%s392 + $0x18] sm:$0xff]
    %s397 = scalar_lea.vmem [#allocation8], 32
    %v398 = vld [vmem:[%s397] sm:$0xff]
    %v399 = vld [vmem:[%s397 + $0x8] sm:$0xff]
    %v400 = vld [vmem:[%s397 + $0x10] sm:$0xff]
    %v401 = vld [vmem:[%s397 + $0x18] sm:$0xff]
    %s402 = scalar_lea.vmem %s7, 1
    %v403 = vld [vmem:[%s402] sm:$0x1]
    %v405 = vsel %vm192, %v385, 0
    %v408 = vsel %vm192, %v386, 0
    %410 = vmatpush.msra.mxu0 0.0
    %411 = vmatpush.msra.mxu0 0.0
    %412 = vmatpush.msra.mxu0 0.0
    %413 = vmatpush.msra.mxu0 0.0
    %414 = vmatpush.msra.mxu0 0.0
    %415 = vmatpush.msra.mxu0 0.0
    %416 = vmatpush.msra.mxu0 0.0
    %417 = vmatpush.msra.mxu0 0.0
    %418 = vmatpush.msra.mxu0 0.0
    %419 = vmatpush.msra.mxu0 0.0
    %420 = vmatpush.msra.mxu0 0.0
    %421 = vmatpush.msra.mxu0 0.0
    %422 = vmatpush.msra.mxu0 %v391
    %423 = vmatpush.msra.mxu0 %v390
    %424 = vmatpush.msra.mxu0 %v389
    %425 = vmatpush.msra.mxu0 %v388
    %426 = vmatmul.f32.gmra.mxu0 %v405
    %v427 = vpop.f32.mrf.mxu0
    %v428 = vadd.f32 0.0, %v427
    %429 = vmatmul.f32.gmra.mxu0 %v408
    %v430 = vpop.f32.mrf.mxu0
    %v431 = vadd.f32 0.0, %v430
    %432 = vdwg.mxu0
    %v434 = vsel %vm192, %v428, 0
    %v437 = vsel %vm192, %v431, 0
    %439 = vmatpush.msra.mxu0 0.0
    %440 = vmatpush.msra.mxu0 0.0
    %441 = vmatpush.msra.mxu0 0.0
    %442 = vmatpush.msra.mxu0 0.0
    %443 = vmatpush.msra.mxu0 0.0
    %444 = vmatpush.msra.mxu0 0.0
    %445 = vmatpush.msra.mxu0 0.0
    %446 = vmatpush.msra.mxu0 0.0
    %447 = vmatpush.msra.mxu0 0.0
    %448 = vmatpush.msra.mxu0 0.0
    %449 = vmatpush.msra.mxu0 0.0
    %450 = vmatpush.msra.mxu0 0.0
    %451 = vmatpush.msra.mxu0 %v401
    %452 = vmatpush.msra.mxu0 %v400
    %453 = vmatpush.msra.mxu0 %v399
    %454 = vmatpush.msra.mxu0 %v398
    %455 = vmatmul.f32.gmra.mxu0 %v434
    %v456 = vpop.f32.mrf.mxu0
    %v457 = vadd.f32 0.0, %v456
    %458 = vmatmul.f32.gmra.mxu0 %v437
    %v459 = vpop.f32.mrf.mxu0
    %v460 = vadd.f32 0.0, %v459
    %461 = vdwg.mxu0
    %v462 = vmul.f32 %v169, %v457
    %v463 = vmul.f32 %v170, %v460
    %v464 = vsel %vm253, %v462, 0.0
    %v465 = vsel %vm253, %v463, 0.0
    %v466 = vadd.f32 %v464, %v465
    %v467 = vrot.slane %v466, 4
    %v468 = vadd.f32 %v466, %v467
    %v469 = vrot.slane %v468, 2
    %v470 = vadd.f32 %v468, %v469
    %v471 = vrot.slane %v470, 1
    %v472 = vadd.f32 %v470, %v471
    %473 = vmatpush.msra.mxu0 0.0
    %474 = vmatpush.msra.mxu0 0.0
    %475 = vmatpush.msra.mxu0 0.0
    %476 = vmatpush.msra.mxu0 0.0
    %477 = vmatpush.msra.mxu0 0.0
    %478 = vmatpush.msra.mxu0 0.0
    %479 = vmatpush.msra.mxu0 0.0
    %480 = vmatpush.msra.mxu0 0.0
    %481 = vmatpush.msra.mxu0 0.0
    %482 = vmatpush.msra.mxu0 0.0
    %483 = vmatpush.msra.mxu0 0.0
    %484 = vmatpush.msra.mxu0 0.0
    %485 = vmatpush.msra.mxu0 %v396
    %486 = vmatpush.msra.mxu0 %v395
    %487 = vmatpush.msra.mxu0 %v394
    %488 = vmatpush.msra.mxu0 %v393
    %489 = vmatmul.f32.gmra.mxu0 %v434
    %v490 = vpop.f32.mrf.mxu0
    %v491 = vadd.f32 %v472, %v490
    %492 = vmatmul.f32.gmra.mxu0 %v437
    %v493 = vpop.f32.mrf.mxu0
    %v494 = vadd.f32 %v472, %v493
    %495 = vdwg.mxu0
    %vm496 = vcmp.gt.f32.partialorder %v491, 0.0
    %vm497 = vcmp.gt.f32.partialorder %v494, 0.0
    %v498 = vmul.f32 %v491, 0.2
    %v499 = vmul.f32 %v494, 0.2
    %v500 = vsel %vm496, %v491, %v498
    %v501 = vsel %vm497, %v494, %v499
    %v502 = vadd.f32 %v500, %v167
    %v503 = vadd.f32 %v501, %v168
    %v504 = vsel %vm253, %v502, -inf
    %505 = vmax.xlane.f32.xlu0 %v504
    %v506 = vpop.xlane.xlu0 %505
    %v507 = vsel %vm253, %v503, -inf
    %508 = vmax.xlane.f32.xlu0 %v507
    %v509 = vpop.xlane.xlu0 %508
    %v510 = vsub.f32 %v502, %v506
    %v511 = vsub.f32 %v503, %v509
    %v512 = vmul.f32 %v510, 1.442695
    %v513 = vpow.pop %v512
    %v514 = vmul.f32 %v511, 1.442695
    %v515 = vpow.pop %v514
    %v516 = vmul.f32 %v428, %v171
    %v517 = vmul.f32 %v431, %v172
    %v518 = vmul.f32 %v428, %v173
    %v519 = vmul.f32 %v431, %v174
    %v520 = vmul.f32 %v428, %v175
    %v521 = vmul.f32 %v431, %v176
    %v522 = vmul.f32 %v428, %v177
    %v523 = vmul.f32 %v431, %v178
    %v525 = vsel %vm253, %v513, 0
    %v528 = vsel %vm253, %v515, 0
    %530 = vmatpush.msra.mxu0 0.0
    %531 = vmatpush.msra.mxu0 0.0
    %532 = vmatpush.msra.mxu0 0.0
    %533 = vmatpush.msra.mxu0 0.0
    %534 = vmatpush.msra.mxu0 0.0
    %535 = vmatpush.msra.mxu0 0.0
    %536 = vmatpush.msra.mxu0 0.0
    %537 = vmatpush.msra.mxu0 0.0
    %538 = vmatpush.msra.mxu0 %v523
    %539 = vmatpush.msra.mxu0 %v522
    %540 = vmatpush.msra.mxu0 %v521
    %541 = vmatpush.msra.mxu0 %v520
    %542 = vmatpush.msra.mxu0 %v519
    %543 = vmatpush.msra.mxu0 %v518
    %544 = vmatpush.msra.mxu0 %v517
    %545 = vmatpush.msra.mxu0 %v516
    %546 = vmatmul.f32.gmra.mxu0 %v525
    %v547 = vpop.f32.mrf.mxu0
    %v548 = vadd.f32 0.0, %v547
    %549 = vmatmul.f32.gmra.mxu0 %v528
    %v550 = vpop.f32.mrf.mxu0
    %v551 = vadd.f32 0.0, %v550
    %552 = vdwg.mxu0
    %553 = vmatpush.msra.mxu0 0.0
    %554 = vmatpush.msra.mxu0 0.0
    %555 = vmatpush.msra.mxu0 0.0
    %556 = vmatpush.msra.mxu0 0.0
    %557 = vmatpush.msra.mxu0 0.0
    %558 = vmatpush.msra.mxu0 0.0
    %559 = vmatpush.msra.mxu0 0.0
    %560 = vmatpush.msra.mxu0 0.0
    %561 = vmatpush.msra.mxu0 %v178
    %562 = vmatpush.msra.mxu0 %v177
    %563 = vmatpush.msra.mxu0 %v176
    %564 = vmatpush.msra.mxu0 %v175
    %565 = vmatpush.msra.mxu0 %v174
    %566 = vmatpush.msra.mxu0 %v173
    %567 = vmatpush.msra.mxu0 %v172
    %568 = vmatpush.msra.mxu0 %v171
    %569 = vmatmul.f32.gmra.mxu0 %v525
    %v570 = vpop.f32.mrf.mxu0
    %v571 = vadd.f32 0.0, %v570
    %572 = vmatmul.f32.gmra.mxu0 %v528
    %v573 = vpop.f32.mrf.mxu0
    %v574 = vadd.f32 0.0, %v573
    %575 = vdwg.mxu0
    %v576 = vrcp.pop %v571
    %v577 = vrcp.pop %v574
    %v578 = vmul.f32 %v548, %v576
    %v579 = vmul.f32 %v551, %v577
    %v581 = vperm.slane %v403, 0
    %v583 = vadd.f32 %v578, %v581
    %v584 = vadd.f32 %v579, %v581
    %vm585 = vcmp.gt.f32.partialorder %v583, 0.0
    %vm586 = vcmp.gt.f32.partialorder %v584, 0.0
    %v587 = vmin.f32 %v583, 0.0
    %v588 = vmin.f32 %v584, 0.0
    %v589 = vmul.f32 %v587, 1.442695
    %v590 = vpow.pop %v589
    %v591 = vmul.f32 %v588, 1.442695
    %v592 = vpow.pop %v591
    %v593 = vsub.f32 %v590, 1.0
    %v594 = vsub.f32 %v592, 1.0
    %v595 = vsel %vm585, %v583, %v593
    %v596 = vsel %vm586, %v584, %v594
    %v597 = vld [vmem:[%s10] sm:$0x3]
    %v599 = vsel %vm137, %v597, 0
    %601 = vmatpush.msra.mxu0 0.0
    %602 = vmatpush.msra.mxu0 0.0
    %603 = vmatpush.msra.mxu0 0.0
    %604 = vmatpush.msra.mxu0 0.0
    %605 = vmatpush.msra.mxu0 0.0
    %606 = vmatpush.msra.mxu0 0.0
    %607 = vmatpush.msra.mxu0 0.0
    %608 = vmatpush.msra.mxu0 0.0
    %609 = vmatpush.msra.mxu0 0.0
    %610 = vmatpush.msra.mxu0 0.0
    %611 = vmatpush.msra.mxu0 0.0
    %612 = vmatpush.msra.mxu0 0.0
    %613 = vmatpush.msra.mxu0 0.0
    %614 = vmatpush.msra.mxu0 0.0
    %615 = vmatpush.msra.mxu0 %v596
    %616 = vmatpush.msra.mxu0 %v595
    %617 = vmatmul.f32.gmra.mxu0 %v599
    %v618 = vpop.f32.mrf.mxu0
    %v619 = vadd.f32 0.0, %v618
    %620 = vdwg.mxu0
    %v621 = vld [vmem:[%s11] sm:$0x3]
    %v623 = vsel %vm137, %v621, 0
    %625 = vmatpush.msra.mxu0 0.0
    %626 = vmatpush.msra.mxu0 0.0
    %627 = vmatpush.msra.mxu0 0.0
    %628 = vmatpush.msra.mxu0 0.0
    %629 = vmatpush.msra.mxu0 0.0
    %630 = vmatpush.msra.mxu0 0.0
    %631 = vmatpush.msra.mxu0 0.0
    %632 = vmatpush.msra.mxu0 0.0
    %633 = vmatpush.msra.mxu0 0.0
    %634 = vmatpush.msra.mxu0 0.0
    %635 = vmatpush.msra.mxu0 0.0
    %636 = vmatpush.msra.mxu0 0.0
    %637 = vmatpush.msra.mxu0 0.0
    %638 = vmatpush.msra.mxu0 0.0
    %639 = vmatpush.msra.mxu0 %v596
    %640 = vmatpush.msra.mxu0 %v595
    %641 = vmatmul.f32.gmra.mxu0 %v623
    %v642 = vpop.f32.mrf.mxu0
    %v643 = vadd.f32 0.0, %v642
    %644 = vdwg.mxu0
    %v645 = vld [vmem:[%s12] sm:$0xff]
    %v646 = vld [vmem:[%s12 + $0x8] sm:$0xff]
    %v647 = vld [vmem:[%s12 + $0x10] sm:$0xff]
    %v648 = vld [vmem:[%s12 + $0x18] sm:$0xff]
    %v649 = vld [vmem:[%s13] sm:$0xff]
    %v650 = vld [vmem:[%s13 + $0x8] sm:$0xff]
    %v651 = vld [vmem:[%s13 + $0x10] sm:$0xff]
    %v652 = vld [vmem:[%s13 + $0x18] sm:$0xff]
    %v654 = vsel %vm192, %v643, 0
    %656 = vmatpush.msra.mxu0 0.0
    %657 = vmatpush.msra.mxu0 0.0
    %658 = vmatpush.msra.mxu0 0.0
    %659 = vmatpush.msra.mxu0 0.0
    %660 = vmatpush.msra.mxu0 0.0
    %661 = vmatpush.msra.mxu0 0.0
    %662 = vmatpush.msra.mxu0 0.0
    %663 = vmatpush.msra.mxu0 0.0
    %664 = vmatpush.msra.mxu0 0.0
    %665 = vmatpush.msra.mxu0 0.0
    %666 = vmatpush.msra.mxu0 0.0
    %667 = vmatpush.msra.mxu0 0.0
    %668 = vmatpush.msra.mxu0 %v652
    %669 = vmatpush.msra.mxu0 %v651
    %670 = vmatpush.msra.mxu0 %v650
    %671 = vmatpush.msra.mxu0 %v649
    %672 = vmatmul.f32.gmra.mxu0 %v654
    %v673 = vpop.f32.mrf.mxu0
    %v674 = vadd.f32 0.0, %v673
    %675 = vdwg.mxu0
    %v677 = vsel %vm192, %v619, 0
    %679 = vmatpush.msra.mxu0 0.0
    %680 = vmatpush.msra.mxu0 0.0
    %681 = vmatpush.msra.mxu0 0.0
    %682 = vmatpush.msra.mxu0 0.0
    %683 = vmatpush.msra.mxu0 0.0
    %684 = vmatpush.msra.mxu0 0.0
    %685 = vmatpush.msra.mxu0 0.0
    %686 = vmatpush.msra.mxu0 0.0
    %687 = vmatpush.msra.mxu0 0.0
    %688 = vmatpush.msra.mxu0 0.0
    %689 = vmatpush.msra.mxu0 0.0
    %690 = vmatpush.msra.mxu0 0.0
    %691 = vmatpush.msra.mxu0 %v648
    %692 = vmatpush.msra.mxu0 %v647
    %693 = vmatpush.msra.mxu0 %v646
    %694 = vmatpush.msra.mxu0 %v645
    %695 = vmatmul.f32.gmra.mxu0 %v677
    %v696 = vpop.f32.mrf.mxu0
    %v697 = vadd.f32 %v674, %v696
    %698 = vdwg.mxu0
    %v699 = vld [vmem:[%s14] sm:$0x1]
    %v701 = vperm.slane %v699, 0
    %v703 = vadd.f32 %v697, %v701
    %vm704 = vcmask 17408
    %705 = vst.msk [vmem:[#allocation11] sm:$0x3] %vm704, %v703
    // Predicated region
    $region82: #{tpu_custom_call.1} parent=1 // pred_check
      _
    $region83: #{tpu_custom_call.1} parent=1 // pred_check_branch
      %707 = sbr.rel (0) target = $region85
    $region84: #{tpu_custom_call.1} parent=1 // pred_region
      %709 = vsyncadd [#allocation4], 0
      %s711 = sshll.u32 [#allocation11], 4
      %s712 = int_to_ptr.vmem [resolvable:$true] %s711
      %s713 = sshll.u32 %s15, 4
      %s714 = int_to_ptr.hbm [resolvable:$true] %s713
      %716 = dma.vmem_to_hbm [thread:$0]  %s712, 32, %s714, [#allocation4]
    $region85: #{tpu_custom_call.1} parent=1 // pred_fallthru
      _
    // Predicated region
    $region86: #{tpu_custom_call.1} parent=1 // pred_check
      _
    $region87: #{tpu_custom_call.1} parent=1 // pred_check_branch
      %718 = sbr.rel (0) target = $region89
    $region88: #{tpu_custom_call.1} parent=1 // pred_region
      %720 = dma.done [#allocation4], 32
    $region89: #{tpu_custom_call.1} parent=1 // pred_fallthru
      _
    %721 = vsyncpa [#allocation3], 1
    %722 = vsyncpa [#allocation6], 1
    %723 = vsyncpa [#allocation9], 1
    %724 = vsyncpa [#allocation4], 1

</llo_original>
